<compile_context>
chip_gen: v6e
topology: v6e:2x2x1
jax: 0.10.0
libtpu: 0.0.40
codegen_flags: <defaults>
</compile_context>

<pallas_src>
import functools
import math

import jax
import jax.numpy as jnp
from jax.experimental import pallas as pl
from jax.experimental.pallas import tpu as pltpu

MAX_DEPTH = 100.0
N_FREQS = 16
D_MODEL = 32


def _round_up(x, m):
    return (x + m - 1) // m * m


def _pos_enc_kernel(seq_len, inv_max, inv_log_max, tn,
                    d_ref, dnext_ref, freq_ref, wsin_ref, wcos_ref, wrest_ref,
                    out_ref):
    """out_T[d_model, TN] = proj(features(depth))^T, tokens on the lane axis."""
    d = d_ref[...]                                  # [1, TN]
    d_next = dnext_ref[...]                         # [1, TN]

    depth_norm = d * inv_max                        # [1, TN]
    log_depth = jnp.log(d + 1.0) * inv_log_max      # [1, TN]

    args = freq_ref[...] * depth_norm               # [H,1]*[1,TN] -> [H, TN]
    sin_a = jnp.sin(args)
    cos_a = jnp.cos(args)

    # depth_diff: d[t+1] - d[t] within each sequence, zero at the last token of
    # every sequence (matches F.pad(..., (0,0,0,1))).  d_next already carries
    # the neighbouring tile's first value, so tile boundaries are exact.
    lane = jax.lax.broadcasted_iota(jnp.int32, (1, tn), 1)
    if tn % seq_len != 0:
        lane = lane + pl.program_id(0) * tn         # global token index
    is_last = (lane % seq_len) == (seq_len - 1)
    diff = jnp.where(is_last, 0.0, d_next - d)
    diff_norm = jnp.tanh(diff * 20.0)

    # Transposed projection: out_T = W_sin^T @ sin + W_cos^T @ cos + scalar FMAs.
    acc = jnp.dot(wsin_ref[...], sin_a, preferred_element_type=jnp.float32)
    acc = acc + jnp.dot(wcos_ref[...], cos_a, preferred_element_type=jnp.float32)
    wrest = wrest_ref[...]                          # [D, 4] = [dn | ld | dd | bias]
    acc = acc + wrest[:, 0:1] * depth_norm
    acc = acc + wrest[:, 1:2] * log_depth
    acc = acc + wrest[:, 2:3] * diff_norm
    acc = acc + wrest[:, 3:4]
    out_ref[...] = acc


def positional_encoding(depth, freq_bands, w, b, *, max_depth=MAX_DEPTH,
                        tn_cap=2048):
    """depth: [B, S, 1] f32 -> [B, S, d_model] f32."""
    B, S, _ = depth.shape
    N = B * S
    H = freq_bands.shape[0]
    F, D = w.shape
    assert F == 2 * H + 3

    # Token tile on the lane axis.  tn_cap=2048 keeps the double-buffered
    # working set comfortably inside v7x's 64 MiB VMEM while still amortizing
    # the per-step grid overhead on v5e/v6e (raise on v6e for huge N).
    tn = min(tn_cap, _round_up(N, 128))
    n_pad = _round_up(N, tn)

    d_flat = depth.reshape(N).astype(jnp.float32)
    d_next = jnp.roll(d_flat, -1)                   # neighbour stream (cheap, tiny)
    pad = n_pad - N
    if pad:
        d_flat = jnp.pad(d_flat, (0, pad))
        d_next = jnp.pad(d_next, (0, pad))
    d_flat = d_flat.reshape(1, n_pad)
    d_next = d_next.reshape(1, n_pad)

    w = w.astype(jnp.float32)
    freqs = freq_bands.reshape(H, 1).astype(jnp.float32)
    w_sin_t = w[:H, :].T                            # [D, H]
    w_cos_t = w[H:2 * H, :].T                       # [D, H]
    w_rest = jnp.stack(
        [w[2 * H], w[2 * H + 1], w[2 * H + 2], b.astype(jnp.float32)],
        axis=-1)                                    # [D, 4]

    kernel = functools.partial(
        _pos_enc_kernel, S, 1.0 / max_depth, 1.0 / math.log(max_depth + 1.0), tn)

    out_t = pl.pallas_call(
        kernel,
        out_shape=jax.ShapeDtypeStruct((D, n_pad), jnp.float32),
        grid=(n_pad // tn,),
        in_specs=[
            pl.BlockSpec((1, tn), lambda i: (0, i)),    # depth (tokens on lanes)
            pl.BlockSpec((1, tn), lambda i: (0, i)),    # shifted depth
            pl.BlockSpec((H, 1), lambda i: (0, 0)),     # freq bands
            pl.BlockSpec((D, H), lambda i: (0, 0)),     # W_sin^T
            pl.BlockSpec((D, H), lambda i: (0, 0)),     # W_cos^T
            pl.BlockSpec((D, 4), lambda i: (0, 0)),     # scalar rows + bias
        ],
        out_specs=pl.BlockSpec((D, tn), lambda i: (0, i)),
        compiler_params=pltpu.CompilerParams(
            dimension_semantics=("parallel",),          # megacore sharding on v7x
            vmem_limit_bytes=32 * 1024 * 1024,
        ),
    )(d_flat, d_next, freqs, w_sin_t, w_cos_t, w_rest)

    # Lane-dense [D, N] store in the kernel; layout plumbing back to [B, S, D]
    # stays in the XLA wrapper.
    return out_t[:, :N].T.reshape(B, S, D)


def reference_forward(depth, freq_bands, w, b, *, max_depth=MAX_DEPTH):
    """Pure-JAX replica of the PyTorch forward (eval mode)."""
    depth_norm = depth / max_depth
    log_depth = jnp.log(depth + 1.0) / math.log(max_depth + 1.0)
    depth_features = jnp.concatenate([depth_norm, log_depth], axis=-1)
    args = depth_norm * freq_bands.reshape(1, 1, -1)
    pe = jnp.concatenate([jnp.sin(args), jnp.cos(args)], axis=-1)
    diff = depth[:, 1:] - depth[:, :-1]
    diff = jnp.pad(diff, ((0, 0), (0, 1), (0, 0)))
    diff_norm = jnp.tanh(diff * 20.0)
    pe = jnp.concatenate([pe, depth_features, diff_norm], axis=-1)
    return pe @ w + b.reshape(1, 1, -1)


def _run_case(key, B, S, tn_cap):
    k_depth, k_w, k_b = jax.random.split(key, 3)
    depth = jax.random.uniform(k_depth, (B, S, 1), jnp.float32,
                               minval=0.1, maxval=80.0)
    freq_bands = 2.0 ** jnp.linspace(0.0, N_FREQS - 1, N_FREQS // 2,
                                     dtype=jnp.float32)
    f_dim = N_FREQS + 2 + 1
    limit = 1.0 / math.sqrt(f_dim)
    w = jax.random.uniform(k_w, (f_dim, D_MODEL), jnp.float32,
                           minval=-limit, maxval=limit)
    b = jax.random.uniform(k_b, (D_MODEL,), jnp.float32,
                           minval=-limit, maxval=limit)

    out = positional_encoding(depth, freq_bands, w, b, tn_cap=tn_cap)
    out = jax.block_until_ready(out)
    ref = reference_forward(depth, freq_bands, w, b)
    assert out.shape == (B, S, D_MODEL), out.shape
    err = jnp.max(jnp.abs(out - ref))
    assert jnp.allclose(out, ref, rtol=1e-5, atol=1e-4), f"max abs err {err}"


if __name__ == "__main__":
    key = jax.random.PRNGKey(0)
    k1, k2 = jax.random.split(key)
    # Small shapes consistent with the module (batch=2, seq=8, d_model=32).
    _run_case(k1, B=2, S=8, tn_cap=2048)
    # Multi-tile case: tile boundaries fall inside sequences, exercising the
    # cross-tile depth_diff path and the parallel grid axis.
    _run_case(k2, B=3, S=100, tn_cap=128)
    print("KERNEL_OK")
</pallas_src>

<mosaic_0001>
module attributes {stable_mosaic.version = 11 : i64} {
  func.func @_pos_enc_kernel(%arg0: i32, %arg1: memref<1x128xf32, #tpu.memory_space<vmem>>, %arg2: memref<1x128xf32, #tpu.memory_space<vmem>>, %arg3: memref<8x1xf32, #tpu.memory_space<vmem>>, %arg4: memref<32x8xf32, #tpu.memory_space<vmem>>, %arg5: memref<32x8xf32, #tpu.memory_space<vmem>>, %arg6: memref<32x4xf32, #tpu.memory_space<vmem>>, %arg7: memref<32x128xf32, #tpu.memory_space<vmem>>) attributes {dimension_semantics = [#tpu.dimension_semantics<parallel>], iteration_bounds = array<i64: 1>, scalar_prefetch = 0 : i64, scratch_operands = 0 : i64, tpu.core_type = #tpu.core_type<tc>, window_params = [{transform_indices = @transform_0, window_bounds = array<i64: 1, 128>}, {transform_indices = @transform_1, window_bounds = array<i64: 1, 128>}, {pipeline_mode = #tpu.pipeline_mode<synchronous>, transform_indices = @transform_2, window_bounds = array<i64: 8, 1>}, {pipeline_mode = #tpu.pipeline_mode<synchronous>, transform_indices = @transform_3, window_bounds = array<i64: 32, 8>}, {pipeline_mode = #tpu.pipeline_mode<synchronous>, transform_indices = @transform_4, window_bounds = array<i64: 32, 8>}, {pipeline_mode = #tpu.pipeline_mode<synchronous>, transform_indices = @transform_5, window_bounds = array<i64: 32, 4>}, {transform_indices = @transform_6, window_bounds = array<i64: 32, 128>}]} {
    %c0 = arith.constant 0 : index
    %c0_0 = arith.constant 0 : index
    %0 = vector.load %arg1[%c0, %c0_0] : memref<1x128xf32, #tpu.memory_space<vmem>>, vector<1x128xf32>
    %c0_1 = arith.constant 0 : index
    %c0_2 = arith.constant 0 : index
    %1 = vector.load %arg2[%c0_1, %c0_2] : memref<1x128xf32, #tpu.memory_space<vmem>>, vector<1x128xf32>
    %cst = arith.constant 0.00999999977 : f32
    %2 = vector.broadcast %cst : f32 to vector<1x128xf32>
    %3 = arith.mulf %0, %2 : vector<1x128xf32>
    %cst_3 = arith.constant 1.000000e+00 : f32
    %4 = vector.broadcast %cst_3 : f32 to vector<1x128xf32>
    %5 = arith.addf %0, %4 : vector<1x128xf32>
    %6 = math.log %5 : vector<1x128xf32>
    %cst_4 = arith.constant 0.216679066 : f32
    %7 = vector.broadcast %cst_4 : f32 to vector<1x128xf32>
    %8 = arith.mulf %6, %7 : vector<1x128xf32>
    %c0_5 = arith.constant 0 : index
    %c0_6 = arith.constant 0 : index
    %9 = vector.load %arg3[%c0_5, %c0_6] : memref<8x1xf32, #tpu.memory_space<vmem>>, vector<8x1xf32>
    %10 = vector.broadcast %9 : vector<8x1xf32> to vector<8x128xf32>
    %11 = vector.broadcast %3 : vector<1x128xf32> to vector<8x128xf32>
    %12 = arith.mulf %10, %11 : vector<8x128xf32>
    %13 = math.sin %12 : vector<8x128xf32>
    %14 = math.cos %12 : vector<8x128xf32>
    %15 = tpu.iota {dimensions = array<i32: 1>} : vector<1x128xi32>
    %c8_i32 = arith.constant 8 : i32
    %c0_i32 = arith.constant 0 : i32
    %16 = arith.cmpi eq, %c8_i32, %c0_i32 : i32
    %c1_i32 = arith.constant 1 : i32
    %17 = arith.select %16, %c1_i32, %c8_i32 : i32
    %18 = vector.broadcast %17 : i32 to vector<1x128xi32>
    %19 = arith.remsi %15, %18 : vector<1x128xi32>
    %c0_i32_7 = arith.constant 0 : i32
    %20 = vector.broadcast %c0_i32_7 : i32 to vector<1x128xi32>
    %21 = arith.cmpi ne, %19, %20 : vector<1x128xi32>
    %c0_i32_8 = arith.constant 0 : i32
    %22 = vector.broadcast %c0_i32_8 : i32 to vector<1x128xi32>
    %23 = arith.cmpi slt, %19, %22 : vector<1x128xi32>
    %c0_i32_9 = arith.constant 0 : i32
    %24 = arith.cmpi slt, %17, %c0_i32_9 : i32
    %25 = vector.broadcast %24 : i1 to vector<1x128xi1>
    %26 = vector.broadcast %25 : vector<1x128xi1> to vector<1x128xi1>
    %27 = arith.xori %23, %26 : vector<1x128xi1>
    %28 = arith.andi %27, %21 : vector<1x128xi1>
    %29 = vector.broadcast %17 : i32 to vector<1x128xi32>
    %30 = arith.addi %19, %29 : vector<1x128xi32>
    %31 = arith.select %28, %30, %19 : vector<1x128xi1>, vector<1x128xi32>
    %c7_i32 = arith.constant 7 : i32
    %32 = vector.broadcast %c7_i32 : i32 to vector<1x128xi32>
    %33 = arith.cmpi eq, %31, %32 : vector<1x128xi32>
    %34 = arith.subf %1, %0 : vector<1x128xf32>
    %cst_10 = arith.constant 0.000000e+00 : f32
    %35 = vector.broadcast %cst_10 : f32 to vector<1x128xf32>
    %36 = arith.select %33, %35, %34 : vector<1x128xi1>, vector<1x128xf32>
    %cst_11 = arith.constant 2.000000e+01 : f32
    %37 = vector.broadcast %cst_11 : f32 to vector<1x128xf32>
    %38 = arith.mulf %36, %37 : vector<1x128xf32>
    %39 = math.tanh %38 : vector<1x128xf32>
    %c0_12 = arith.constant 0 : index
    %c0_13 = arith.constant 0 : index
    %40 = vector.load %arg4[%c0_12, %c0_13] : memref<32x8xf32, #tpu.memory_space<vmem>>, vector<32x8xf32>
    %cst_14 = arith.constant dense<0.000000e+00> : vector<32x128xf32>
    %41 = tpu.matmul %40, %13, %cst_14 {dimension_numbers = #tpu.dot_dimension_numbers<[1], [0], [0], [1], [0, 0, 1, 1], [], []>} : vector<32x8xf32>, vector<8x128xf32>, vector<32x128xf32> -> vector<32x128xf32>
    %c0_15 = arith.constant 0 : index
    %c0_16 = arith.constant 0 : index
    %42 = vector.load %arg5[%c0_15, %c0_16] : memref<32x8xf32, #tpu.memory_space<vmem>>, vector<32x8xf32>
    %cst_17 = arith.constant dense<0.000000e+00> : vector<32x128xf32>
    %43 = tpu.matmul %42, %14, %cst_17 {dimension_numbers = #tpu.dot_dimension_numbers<[1], [0], [0], [1], [0, 0, 1, 1], [], []>} : vector<32x8xf32>, vector<8x128xf32>, vector<32x128xf32> -> vector<32x128xf32>
    %44 = arith.addf %41, %43 : vector<32x128xf32>
    %c0_18 = arith.constant 0 : index
    %c0_19 = arith.constant 0 : index
    %45 = vector.load %arg6[%c0_18, %c0_19] : memref<32x4xf32, #tpu.memory_space<vmem>>, vector<32x4xf32>
    %46 = vector.extract_strided_slice %45 {offsets = [0, 0], sizes = [32, 1], strides = [1, 1]} : vector<32x4xf32> to vector<32x1xf32>
    %47 = vector.broadcast %46 : vector<32x1xf32> to vector<32x128xf32>
    %48 = vector.broadcast %3 : vector<1x128xf32> to vector<32x128xf32>
    %49 = arith.mulf %47, %48 : vector<32x128xf32>
    %50 = arith.addf %44, %49 : vector<32x128xf32>
    %51 = vector.extract_strided_slice %45 {offsets = [0, 1], sizes = [32, 1], strides = [1, 1]} : vector<32x4xf32> to vector<32x1xf32>
    %52 = vector.broadcast %51 : vector<32x1xf32> to vector<32x128xf32>
    %53 = vector.broadcast %8 : vector<1x128xf32> to vector<32x128xf32>
    %54 = arith.mulf %52, %53 : vector<32x128xf32>
    %55 = arith.addf %50, %54 : vector<32x128xf32>
    %56 = vector.extract_strided_slice %45 {offsets = [0, 2], sizes = [32, 1], strides = [1, 1]} : vector<32x4xf32> to vector<32x1xf32>
    %57 = vector.broadcast %56 : vector<32x1xf32> to vector<32x128xf32>
    %58 = vector.broadcast %39 : vector<1x128xf32> to vector<32x128xf32>
    %59 = arith.mulf %57, %58 : vector<32x128xf32>
    %60 = arith.addf %55, %59 : vector<32x128xf32>
    %61 = vector.extract_strided_slice %45 {offsets = [0, 3], sizes = [32, 1], strides = [1, 1]} : vector<32x4xf32> to vector<32x1xf32>
    %62 = vector.broadcast %61 : vector<32x1xf32> to vector<32x128xf32>
    %63 = arith.addf %60, %62 : vector<32x128xf32>
    %c0_20 = arith.constant 0 : index
    %c0_21 = arith.constant 0 : index
    %64 = vector.load %arg7[%c0_20, %c0_21] : memref<32x128xf32, #tpu.memory_space<vmem>>, vector<32x128xf32>
    tpu.vector_store %arg7[%c0_20, %c0_21], %63 {strides = array<i32>} : memref<32x128xf32, #tpu.memory_space<vmem>>, vector<32x128xf32>,
    return
  }
  func.func @transform_0(%arg0: i32) -> (i32, i32) {
    %c0_i32 = arith.constant 0 : i32
    %c0_i32_0 = arith.constant 0 : i32
    return %c0_i32, %arg0 : i32, i32
  }
  func.func @transform_1(%arg0: i32) -> (i32, i32) {
    %c0_i32 = arith.constant 0 : i32
    %c0_i32_0 = arith.constant 0 : i32
    return %c0_i32, %arg0 : i32, i32
  }
  func.func @transform_2(%arg0: i32) -> (i32, i32) {
    %c0_i32 = arith.constant 0 : i32
    %c0_i32_0 = arith.constant 0 : i32
    %c0_i32_1 = arith.constant 0 : i32
    return %c0_i32, %c0_i32_0 : i32, i32
  }
  func.func @transform_3(%arg0: i32) -> (i32, i32) {
    %c0_i32 = arith.constant 0 : i32
    %c0_i32_0 = arith.constant 0 : i32
    %c0_i32_1 = arith.constant 0 : i32
    return %c0_i32, %c0_i32_0 : i32, i32
  }
  func.func @transform_4(%arg0: i32) -> (i32, i32) {
    %c0_i32 = arith.constant 0 : i32
    %c0_i32_0 = arith.constant 0 : i32
    %c0_i32_1 = arith.constant 0 : i32
    return %c0_i32, %c0_i32_0 : i32, i32
  }
  func.func @transform_5(%arg0: i32) -> (i32, i32) {
    %c0_i32 = arith.constant 0 : i32
    %c0_i32_0 = arith.constant 0 : i32
    %c0_i32_1 = arith.constant 0 : i32
    return %c0_i32, %c0_i32_0 : i32, i32
  }
  func.func @transform_6(%arg0: i32) -> (i32, i32) {
    %c0_i32 = arith.constant 0 : i32
    %c0_i32_0 = arith.constant 0 : i32
    return %c0_i32, %arg0 : i32, i32
  }
}

</mosaic_0001>

<llo_original>
// kernel: tpu_custom_call.1
$region0: #{tpu_custom_call.1}
  #allocation0 [shape = 'u32[]', space=smem, size = 0x4, offset = 0x4, fixed_abs, tag = 'smem constant byte address 0x4 - core index']
  #allocation1 [shape = 'u32[144,128]{1,0:T(1,128)}', space=vmem, size = 0x12000, scoped, tag = 'internal scratch']
  %s0 = inlined_call_operand.vmem [shape: f32[1,128], index: 0, kind: input, shape index: {}]
  %s1 = inlined_call_operand.vmem [shape: f32[1,128], index: 1, kind: input, shape index: {}]
  %s2 = inlined_call_operand.vmem [shape: f32[8,1], index: 2, kind: input, shape index: {}]
  %s3 = inlined_call_operand.vmem [shape: f32[32,8], index: 3, kind: input, shape index: {}]
  %s4 = inlined_call_operand.vmem [shape: f32[32,8], index: 4, kind: input, shape index: {}]
  %s5 = inlined_call_operand.vmem [shape: f32[32,4], index: 5, kind: input, shape index: {}]
  %s6 = inlined_call_operand.hbm [shape: f32[32,128], index: 6, kind: output, shape index: {}]
  %s7 = sld [smem:[#allocation0]]
  $region34: #{tpu_custom_call.1} parent=0
    _
  %s9 = ssub.s32 1, %s7
  %s10 = scalar_select 0, %s9, %s7
  $region1: #{tpu_custom_call.1} parent=0
    #allocation2 [shape = 'u8[16384]{0}', space=vmem, size = 0x4000, scoped, tag = 'output window, operand 0, single buffered']
    #allocation3 [shape = 's32[1]{0}', space=sflag, size = 0x4, scoped, tag = 'scoped memory for tpu_custom_call.1']
    %11 = vsyncpa [#allocation3], 0
    // Predicated region
    $region2: #{tpu_custom_call.1} parent=1 // pred_check
      _
    $region3: #{tpu_custom_call.1} parent=1 // pred_check_branch
      %13 = sbr.rel (0) target = $region5
    $region4: #{tpu_custom_call.1} parent=1 // pred_region
      _
    $region5: #{tpu_custom_call.1} parent=1 // pred_fallthru
      _
    // Predicated region
    $region6: #{tpu_custom_call.1} parent=1 // pred_check
      _
    $region7: #{tpu_custom_call.1} parent=1 // pred_check_branch
      %15 = sbr.rel (0) target = $region9
    $region8: #{tpu_custom_call.1} parent=1 // pred_region
      _
    $region9: #{tpu_custom_call.1} parent=1 // pred_fallthru
      _
    // Predicated region
    $region10: #{tpu_custom_call.1} parent=1 // pred_check
      _
    $region11: #{tpu_custom_call.1} parent=1 // pred_check_branch
      %17 = sbr.rel (0) target = $region13
    $region12: #{tpu_custom_call.1} parent=1 // pred_region
      _
    $region13: #{tpu_custom_call.1} parent=1 // pred_fallthru
      _
    // Predicated region
    $region14: #{tpu_custom_call.1} parent=1 // pred_check
      _
    $region15: #{tpu_custom_call.1} parent=1 // pred_check_branch
      %19 = sbr.rel (0) target = $region17
    $region16: #{tpu_custom_call.1} parent=1 // pred_region
      _
    $region17: #{tpu_custom_call.1} parent=1 // pred_fallthru
      _
    // Predicated region
    $region18: #{tpu_custom_call.1} parent=1 // pred_check
      _
    $region19: #{tpu_custom_call.1} parent=1 // pred_check_branch
      %21 = sbr.rel (0) target = $region21
    $region20: #{tpu_custom_call.1} parent=1 // pred_region
      _
    $region21: #{tpu_custom_call.1} parent=1 // pred_fallthru
      _
    // Predicated region
    $region22: #{tpu_custom_call.1} parent=1 // pred_check
      _
    $region23: #{tpu_custom_call.1} parent=1 // pred_check_branch
      %23 = sbr.rel (0) target = $region25
    $region24: #{tpu_custom_call.1} parent=1 // pred_region
      _
    $region25: #{tpu_custom_call.1} parent=1 // pred_fallthru
      _
    %v24 = vld [vmem:[%s0] sm:$0x1]
    %v25 = vld [vmem:[%s1] sm:$0x1]
    %v26 = vmul.f32 %v24, 0.01
    %v27 = vadd.f32 %v24, 1.0
    %v28 = vlog2.pop %v27
    %v29 = vmul.f32 %v28, 0.6931472
    %v30 = vmul.f32 %v29, 0.21667907
    %v31 = vld [vmem:[%s2] sm:$0xff]
    %33 = vset.pattern.permute.xlu0 0
    %34 = vperm.xlu0 %33, %v31
    %v35 = vpop.permute.xlu0 %34
    %v38 = vlaneseq
    %v39 = vshrl.u32 %v38, 7
    %v40 = vsub.s32 0, %v39
    %v41 = vrot.slane %v26, %v40
    %v43 = vmul.f32 %v35, %v41
    %v44 = vand.u32 2147483647, %v43
    %vm45 = vcmp.le.f32.partialorder %v44, 0.7853982
    %vm46 = vcmp.lt.s32.totalorder %v43, 0
    %v47 = vand.u32 %v43, 2139095040
    %v48 = vshrl.u32 %v47, 23
    %v49 = vsub.s32 %v48, 127
    %v50 = vand.u32 2147483647, %v43
    %v51 = vand.u32 %v50, 8388607
    %v52 = vor.u32 %v51, 8388608
    %v53 = vsub.s32 0, %v52
    %v54 = vadd.s32 %v49, 1
    %vm55 = vcmp.gt.s32.totalorder %v54, 0
    %v56 = vsel %vm55, %v54, 0
    %v57 = vshrl.u32 %v56, 5
    %v58 = vand.u32 %v56, 31
    %v59 = vsub.s32 32, %v58
    %v60 = vshrl.u32 683565275, %v59
    %v61 = vshll.u32 683565275, %v58
    %v62 = vshrl.u32 2475754826, %v59
    %v63 = vor.u32 %v61, %v62
    %v64 = vshll.u32 2475754826, %v58
    %v65 = vshrl.u32 2131351028, %v59
    %v66 = vor.u32 %v64, %v65
    %v67 = vshll.u32 2131351028, %v58
    %v68 = vshrl.u32 2102212464, %v59
    %v69 = vor.u32 %v67, %v68
    %v70 = vshll.u32 2102212464, %v58
    %v71 = vshrl.u32 920167782, %v59
    %v72 = vor.u32 %v70, %v71
    %v73 = vshll.u32 920167782, %v58
    %v74 = vshrl.u32 1326507024, %v59
    %v75 = vor.u32 %v73, %v74
    %vm76 = vcmp.lt.s32.totalorder %v57, 1
    %vm77 = vcmp.lt.s32.totalorder %v57, 2
    %vm78 = vcmp.lt.s32.totalorder %v57, 3
    %vm79 = vcmp.lt.s32.totalorder %v57, 4
    %v80 = vsel %vm76, %v60, %v63
    %v81 = vsel %vm79, %v69, 2102212464
    %v82 = vsel %vm78, %v66, %v81
    %v83 = vsel %vm77, %v80, %v82
    %v84 = vsel %vm76, %v63, %v66
    %v85 = vsel %vm79, %v72, 920167782
    %v86 = vsel %vm78, %v69, %v85
    %v87 = vsel %vm77, %v84, %v86
    %v88 = vsel %vm76, %v66, %v69
    %v89 = vsel %vm79, %v75, 1326507024
    %v90 = vsel %vm78, %v72, %v89
    %v91 = vsel %vm77, %v88, %v90
    %v92 = vshll.u32 %v52, 8
    %v93 = vmul.u32.u64.compose %v92, %v91
    %v94 = vextract.low.u32 %v93
    %v95 = vextract.high.u32 %v93
    %v96 = vmul.u32.u64.compose %v92, %v87
    %v97 = vextract.low.u32 %v96
    %v98 = vextract.high.u32 %v96
    %v99 = vmul.u32 %v92, %v83
    %v100 = vadd.s32 %v95, %v97
    %vm101 = vc.u32 %v95, %v97
    %v102 = vadd.s32 %v98, 1
    %v103 = vsel %vm101, %v102, %v98
    %v104 = vadd.s32 %v99, %v103
    %v105 = vadd.s32 %v104, 536870912
    %v106 = vshrl.u32 %v105, 30
    %v107 = vshll.u32 %v106, 30
    %v108 = vsub.s32 %v104, %v107
    %vm109 = vcmp.lt.s32.totalorder %v108, 0
    %v110 = vsub.s32 0, %v108
    %v111 = vsel %vm109, %v110, %v108
    %v112 = vclz %v111
    %v113 = vsub.s32 %v112, 2
    %vm114 = vcmp.gt.s32.totalorder 0, %v113
    %v115 = vsel %vm114, 0, %v113
    %v116 = vsub.s32 32, %v115
    %v117 = vshll.u32 %v108, %v115
    %v118 = vshrl.u32 %v100, %v116
    %v119 = vor.u32 %v117, %v118
    %v120 = vsub.s32 4294967266, %v115
    %v121 = vadd.s32 %v120, 127
    %v122 = vshll.u32 %v121, 23
    %v123 = vor.u32 4788187, %v122
    %v124 = vand.u32 2147483647, %v123
    %v126 = vcvt.s32.f32 %v119
    %v127 = vmul.f32 %v126, %v124
    %v128 = vxor.u32 %v127, 2147483648
    %v129 = vsel %vm46, %v128, %v127
    %v130 = vsub.s32 4, %v106
    %v131 = vsel %vm46, %v130, %v106
    %v132 = vsel %vm45, %v43, %v129
    %v133 = vsel %vm45, 0, %v131
    %v134 = vcosq.f32.pop %v132
    %v135 = vsinq.f32.pop %v132
    %vm136 = vweird.f32 %v43
    %v137 = vadd.s32 %v133, 3
    %v138 = vand.u32 %v137, 3
    %vm139 = vcmp.lt.s32.totalorder %v138, 2
    %vm140 = vcmp.eq.s32.totalorder %v138, 0
    %v141 = vxor.u32 %v135, 2147483648
    %v142 = vsel %vm140, %v134, %v141
    %vm143 = vcmp.eq.s32.totalorder %v138, 2
    %v144 = vxor.u32 %v134, 2147483648
    %v145 = vsel %vm143, %v144, %v135
    %v146 = vsel %vm139, %v142, %v145
    %v147 = vsel %vm136, nan, %v146
    %v148 = vand.u32 2147483647, %v43
    %vm149 = vcmp.le.f32.partialorder %v148, 0.7853982
    %vm150 = vcmp.lt.s32.totalorder %v43, 0
    %v151 = vand.u32 %v43, 2139095040
    %v152 = vshrl.u32 %v151, 23
    %v153 = vsub.s32 %v152, 127
    %v154 = vand.u32 2147483647, %v43
    %v155 = vand.u32 %v154, 8388607
    %v156 = vor.u32 %v155, 8388608
    %v157 = vsub.s32 0, %v156
    %v158 = vadd.s32 %v153, 1
    %vm159 = vcmp.gt.s32.totalorder %v158, 0
    %v160 = vsel %vm159, %v158, 0
    %v161 = vshrl.u32 %v160, 5
    %v162 = vand.u32 %v160, 31
    %v163 = vsub.s32 32, %v162
    %v164 = vshrl.u32 683565275, %v163
    %v165 = vshll.u32 683565275, %v162
    %v166 = vshrl.u32 2475754826, %v163
    %v167 = vor.u32 %v165, %v166
    %v168 = vshll.u32 2475754826, %v162
    %v169 = vshrl.u32 2131351028, %v163
    %v170 = vor.u32 %v168, %v169
    %v171 = vshll.u32 2131351028, %v162
    %v172 = vshrl.u32 2102212464, %v163
    %v173 = vor.u32 %v171, %v172
    %v174 = vshll.u32 2102212464, %v162
    %v175 = vshrl.u32 920167782, %v163
    %v176 = vor.u32 %v174, %v175
    %v177 = vshll.u32 920167782, %v162
    %v178 = vshrl.u32 1326507024, %v163
    %v179 = vor.u32 %v177, %v178
    %vm180 = vcmp.lt.s32.totalorder %v161, 1
    %vm181 = vcmp.lt.s32.totalorder %v161, 2
    %vm182 = vcmp.lt.s32.totalorder %v161, 3
    %vm183 = vcmp.lt.s32.totalorder %v161, 4
    %v184 = vsel %vm180, %v164, %v167
    %v185 = vsel %vm183, %v173, 2102212464
    %v186 = vsel %vm182, %v170, %v185
    %v187 = vsel %vm181, %v184, %v186
    %v188 = vsel %vm180, %v167, %v170
    %v189 = vsel %vm183, %v176, 920167782
    %v190 = vsel %vm182, %v173, %v189
    %v191 = vsel %vm181, %v188, %v190
    %v192 = vsel %vm180, %v170, %v173
    %v193 = vsel %vm183, %v179, 1326507024
    %v194 = vsel %vm182, %v176, %v193
    %v195 = vsel %vm181, %v192, %v194
    %v196 = vshll.u32 %v156, 8
    %v197 = vmul.u32.u64.compose %v196, %v195
    %v198 = vextract.low.u32 %v197
    %v199 = vextract.high.u32 %v197
    %v200 = vmul.u32.u64.compose %v196, %v191
    %v201 = vextract.low.u32 %v200
    %v202 = vextract.high.u32 %v200
    %v203 = vmul.u32 %v196, %v187
    %v204 = vadd.s32 %v199, %v201
    %vm205 = vc.u32 %v199, %v201
    %v206 = vadd.s32 %v202, 1
    %v207 = vsel %vm205, %v206, %v202
    %v208 = vadd.s32 %v203, %v207
    %v209 = vadd.s32 %v208, 536870912
    %v210 = vshrl.u32 %v209, 30
    %v211 = vshll.u32 %v210, 30
    %v212 = vsub.s32 %v208, %v211
    %vm213 = vcmp.lt.s32.totalorder %v212, 0
    %v214 = vsub.s32 0, %v212
    %v215 = vsel %vm213, %v214, %v212
    %v216 = vclz %v215
    %v217 = vsub.s32 %v216, 2
    %vm218 = vcmp.gt.s32.totalorder 0, %v217
    %v219 = vsel %vm218, 0, %v217
    %v220 = vsub.s32 32, %v219
    %v221 = vshll.u32 %v212, %v219
    %v222 = vshrl.u32 %v204, %v220
    %v223 = vor.u32 %v221, %v222
    %v224 = vsub.s32 4294967266, %v219
    %v225 = vadd.s32 %v224, 127
    %v226 = vshll.u32 %v225, 23
    %v227 = vor.u32 4788187, %v226
    %v228 = vand.u32 2147483647, %v227
    %v230 = vcvt.s32.f32 %v223
    %v231 = vmul.f32 %v230, %v228
    %v232 = vxor.u32 %v231, 2147483648
    %v233 = vsel %vm150, %v232, %v231
    %v234 = vsub.s32 4, %v210
    %v235 = vsel %vm150, %v234, %v210
    %v236 = vsel %vm149, %v43, %v233
    %v237 = vsel %vm149, 0, %v235
    %v238 = vcosq.f32.pop %v236
    %v239 = vsinq.f32.pop %v236
    %vm240 = vweird.f32 %v43
    %v241 = vand.u32 %v237, 3
    %vm242 = vcmp.lt.s32.totalorder %v241, 2
    %vm243 = vcmp.eq.s32.totalorder %v241, 0
    %v244 = vxor.u32 %v239, 2147483648
    %v245 = vsel %vm243, %v238, %v244
    %vm246 = vcmp.eq.s32.totalorder %v241, 2
    %v247 = vxor.u32 %v238, 2147483648
    %v248 = vsel %vm246, %v247, %v239
    %v249 = vsel %vm242, %v245, %v248
    %v250 = vsel %vm240, nan, %v249
    %v251 = vlaneseq
    %v252 = vand.u32 %v251, 127
    %vm253 = vcmp.lt.s32.totalorder %v252, 0
    %v254 = vsub.s32 0, %v252
    %v255 = vsel %vm253, %v254, %v252
    %v256 = vshrl.u32 %v255, 3
    %v257 = vand.u32 %v255, 7
    %v258 = vsub.s32 0, %v257
    %v259 = vsel %vm253, %v258, %v257
    %vm260 = vcmp.ne.s32.totalorder %v259, 0
    %vm261 = vcmp.lt.s32.totalorder %v259, 0
    %vm262 = vmand %vm261, %vm260
    %v263 = vadd.s32 %v259, 8
    %v264 = vsel %vm262, %v263, %v259
    %vm265 = vcmp.eq.s32.totalorder %v264, 7
    %v266 = vsub.f32 %v25, %v24
    %v267 = vsel %vm265, 0.0, %v266
    %v268 = vmul.f32 %v267, 20.0
    %v269 = vtanh.pop %v268
    %v270 = vld [vmem:[%s3] sm:$0xff]
    %v271 = vld [vmem:[%s3 + $0x8] sm:$0xff]
    %v272 = vld [vmem:[%s3 + $0x10] sm:$0xff]
    %v273 = vld [vmem:[%s3 + $0x18] sm:$0xff]
    %v274 = vld [vmem:[%s4] sm:$0xff]
    %v275 = vld [vmem:[%s4 + $0x8] sm:$0xff]
    %v276 = vld [vmem:[%s4 + $0x10] sm:$0xff]
    %v277 = vld [vmem:[%s4 + $0x18] sm:$0xff]
    %vm278 = vcmask 64512
    %v280 = vsel %vm278, %v274, 0
    %v283 = vsel %vm278, %v275, 0
    %v286 = vsel %vm278, %v276, 0
    %v289 = vsel %vm278, %v277, 0
    %291 = vmatprep.subr.mxu0 0.0
    %292 = vmatpush1.msra.mxu0 0.0
    %293 = vmatprep.subr.mxu0 0.0
    %294 = vmatpush1.msra.mxu0 0.0
    %295 = vmatprep.subr.mxu0 0.0
    %296 = vmatpush1.msra.mxu0 0.0
    %297 = vmatprep.subr.mxu0 0.0
    %298 = vmatpush1.msra.mxu0 0.0
    %299 = vmatprep.subr.mxu0 0.0
    %300 = vmatpush1.msra.mxu0 0.0
    %301 = vmatprep.subr.mxu0 0.0
    %302 = vmatpush1.msra.mxu0 0.0
    %303 = vmatprep.subr.mxu0 0.0
    %304 = vmatpush1.msra.mxu0 0.0
    %305 = vmatprep.subr.mxu0 0.0
    %306 = vmatpush1.msra.mxu0 0.0
    %307 = vmatprep.subr.mxu0 0.0
    %308 = vmatpush1.msra.mxu0 0.0
    %309 = vmatprep.subr.mxu0 0.0
    %310 = vmatpush1.msra.mxu0 0.0
    %311 = vmatprep.subr.mxu0 0.0
    %312 = vmatpush1.msra.mxu0 0.0
    %313 = vmatprep.subr.mxu0 0.0
    %314 = vmatpush1.msra.mxu0 0.0
    %315 = vmatprep.subr.mxu0 0.0
    %316 = vmatpush1.msra.mxu0 0.0
    %317 = vmatprep.subr.mxu0 0.0
    %318 = vmatpush1.msra.mxu0 0.0
    %319 = vmatprep.subr.mxu0 0.0
    %320 = vmatpush1.msra.mxu0 0.0
    %321 = vmatprep.subr.mxu0 0.0
    %322 = vmatpush1.msra.mxu0 %v250
    %323 = vmatprep.subr.mxu0 0.0
    %324 = vmatpush2.msra.mxu0 0.0
    %325 = vmatprep.subr.mxu0 0.0
    %326 = vmatpush2.msra.mxu0 0.0
    %327 = vmatprep.subr.mxu0 0.0
    %328 = vmatpush2.msra.mxu0 0.0
    %329 = vmatprep.subr.mxu0 0.0
    %330 = vmatpush2.msra.mxu0 0.0
    %331 = vmatprep.subr.mxu0 0.0
    %332 = vmatpush2.msra.mxu0 0.0
    %333 = vmatprep.subr.mxu0 0.0
    %334 = vmatpush2.msra.mxu0 0.0
    %335 = vmatprep.subr.mxu0 0.0
    %336 = vmatpush2.msra.mxu0 0.0
    %337 = vmatprep.subr.mxu0 0.0
    %338 = vmatpush2.msra.mxu0 0.0
    %339 = vmatprep.subr.mxu0 0.0
    %340 = vmatpush2.msra.mxu0 0.0
    %341 = vmatprep.subr.mxu0 0.0
    %342 = vmatpush2.msra.mxu0 0.0
    %343 = vmatprep.subr.mxu0 0.0
    %344 = vmatpush2.msra.mxu0 0.0
    %345 = vmatprep.subr.mxu0 0.0
    %346 = vmatpush2.msra.mxu0 0.0
    %347 = vmatprep.subr.mxu0 0.0
    %348 = vmatpush2.msra.mxu0 0.0
    %349 = vmatprep.subr.mxu0 0.0
    %350 = vmatpush2.msra.mxu0 0.0
    %351 = vmatprep.subr.mxu0 0.0
    %352 = vmatpush2.msra.mxu0 0.0
    %353 = vmatprep.subr.mxu0 0.0
    %354 = vmatpush2.msra.mxu0 0.0
    %355 = vmatprep.mubr.f32.mxu0 0.0
    %356 = vmatmul.mubr.f32.gmra.mxu0 %v280
    %v357 = vpop.f32.mrf.mxu0
    %v358 = vadd.f32 0.0, %v357
    %v359 = vpop.f32.mrf.mxu0
    %360 = vmatprep.mubr.f32.mxu0 0.0
    %361 = vmatmul.mubr.f32.gmra.mxu0 %v283
    %v362 = vpop.f32.mrf.mxu0
    %v363 = vadd.f32 0.0, %v362
    %v364 = vpop.f32.mrf.mxu0
    %365 = vmatprep.mubr.f32.mxu0 0.0
    %366 = vmatmul.mubr.f32.gmra.mxu0 %v286
    %v367 = vpop.f32.mrf.mxu0
    %v368 = vadd.f32 0.0, %v367
    %v369 = vpop.f32.mrf.mxu0
    %370 = vmatprep.mubr.f32.mxu0 0.0
    %371 = vmatmul.mubr.f32.gmra.mxu0 %v289
    %v372 = vpop.f32.mrf.mxu0
    %v373 = vadd.f32 0.0, %v372
    %v374 = vpop.f32.mrf.mxu0
    %375 = vdwg.mxu0
    %v377 = vsel %vm278, %v270, 0
    %v380 = vsel %vm278, %v271, 0
    %v383 = vsel %vm278, %v272, 0
    %v386 = vsel %vm278, %v273, 0
    %388 = vmatprep.subr.mxu0 0.0
    %389 = vmatpush1.msra.mxu0 0.0
    %390 = vmatprep.subr.mxu0 0.0
    %391 = vmatpush1.msra.mxu0 0.0
    %392 = vmatprep.subr.mxu0 0.0
    %393 = vmatpush1.msra.mxu0 0.0
    %394 = vmatprep.subr.mxu0 0.0
    %395 = vmatpush1.msra.mxu0 0.0
    %396 = vmatprep.subr.mxu0 0.0
    %397 = vmatpush1.msra.mxu0 0.0
    %398 = vmatprep.subr.mxu0 0.0
    %399 = vmatpush1.msra.mxu0 0.0
    %400 = vmatprep.subr.mxu0 0.0
    %401 = vmatpush1.msra.mxu0 0.0
    %402 = vmatprep.subr.mxu0 0.0
    %403 = vmatpush1.msra.mxu0 0.0
    %404 = vmatprep.subr.mxu0 0.0
    %405 = vmatpush1.msra.mxu0 0.0
    %406 = vmatprep.subr.mxu0 0.0
    %407 = vmatpush1.msra.mxu0 0.0
    %408 = vmatprep.subr.mxu0 0.0
    %409 = vmatpush1.msra.mxu0 0.0
    %410 = vmatprep.subr.mxu0 0.0
    %411 = vmatpush1.msra.mxu0 0.0
    %412 = vmatprep.subr.mxu0 0.0
    %413 = vmatpush1.msra.mxu0 0.0
    %414 = vmatprep.subr.mxu0 0.0
    %415 = vmatpush1.msra.mxu0 0.0
    %416 = vmatprep.subr.mxu0 0.0
    %417 = vmatpush1.msra.mxu0 0.0
    %418 = vmatprep.subr.mxu0 0.0
    %419 = vmatpush1.msra.mxu0 %v147
    %420 = vmatprep.subr.mxu0 0.0
    %421 = vmatpush2.msra.mxu0 0.0
    %422 = vmatprep.subr.mxu0 0.0
    %423 = vmatpush2.msra.mxu0 0.0
    %424 = vmatprep.subr.mxu0 0.0
    %425 = vmatpush2.msra.mxu0 0.0
    %426 = vmatprep.subr.mxu0 0.0
    %427 = vmatpush2.msra.mxu0 0.0
    %428 = vmatprep.subr.mxu0 0.0
    %429 = vmatpush2.msra.mxu0 0.0
    %430 = vmatprep.subr.mxu0 0.0
    %431 = vmatpush2.msra.mxu0 0.0
    %432 = vmatprep.subr.mxu0 0.0
    %433 = vmatpush2.msra.mxu0 0.0
    %434 = vmatprep.subr.mxu0 0.0
    %435 = vmatpush2.msra.mxu0 0.0
    %436 = vmatprep.subr.mxu0 0.0
    %437 = vmatpush2.msra.mxu0 0.0
    %438 = vmatprep.subr.mxu0 0.0
    %439 = vmatpush2.msra.mxu0 0.0
    %440 = vmatprep.subr.mxu0 0.0
    %441 = vmatpush2.msra.mxu0 0.0
    %442 = vmatprep.subr.mxu0 0.0
    %443 = vmatpush2.msra.mxu0 0.0
    %444 = vmatprep.subr.mxu0 0.0
    %445 = vmatpush2.msra.mxu0 0.0
    %446 = vmatprep.subr.mxu0 0.0
    %447 = vmatpush2.msra.mxu0 0.0
    %448 = vmatprep.subr.mxu0 0.0
    %449 = vmatpush2.msra.mxu0 0.0
    %450 = vmatprep.subr.mxu0 0.0
    %451 = vmatpush2.msra.mxu0 0.0
    %452 = vmatprep.mubr.f32.mxu0 0.0
    %453 = vmatmul.mubr.f32.gmra.mxu0 %v377
    %v454 = vpop.f32.mrf.mxu0
    %v455 = vadd.f32 %v358, %v454
    %v456 = vpop.f32.mrf.mxu0
    %457 = vmatprep.mubr.f32.mxu0 0.0
    %458 = vmatmul.mubr.f32.gmra.mxu0 %v380
    %v459 = vpop.f32.mrf.mxu0
    %v460 = vadd.f32 %v363, %v459
    %v461 = vpop.f32.mrf.mxu0
    %462 = vmatprep.mubr.f32.mxu0 0.0
    %463 = vmatmul.mubr.f32.gmra.mxu0 %v383
    %v464 = vpop.f32.mrf.mxu0
    %v465 = vadd.f32 %v368, %v464
    %v466 = vpop.f32.mrf.mxu0
    %467 = vmatprep.mubr.f32.mxu0 0.0
    %468 = vmatmul.mubr.f32.gmra.mxu0 %v386
    %v469 = vpop.f32.mrf.mxu0
    %v470 = vadd.f32 %v373, %v469
    %v471 = vpop.f32.mrf.mxu0
    %472 = vdwg.mxu0
    %v473 = vld [vmem:[%s5] sm:$0xff]
    %v474 = vld [vmem:[%s5 + $0x8] sm:$0xff]
    %v475 = vld [vmem:[%s5 + $0x10] sm:$0xff]
    %v476 = vld [vmem:[%s5 + $0x18] sm:$0xff]
    %478 = vset.pattern.permute.xlu0 0
    %479 = vperm.xlu0 %478, %v473
    %v480 = vpop.permute.xlu0 %479
    %483 = vset.pattern.permute.xlu0 0
    %484 = vperm.xlu0 %483, %v474
    %v485 = vpop.permute.xlu0 %484
    %488 = vset.pattern.permute.xlu0 0
    %489 = vperm.xlu0 %488, %v475
    %v490 = vpop.permute.xlu0 %489
    %493 = vset.pattern.permute.xlu0 0
    %494 = vperm.xlu0 %493, %v476
    %v495 = vpop.permute.xlu0 %494
    %v497 = vmul.f32 %v480, %v41
    %v498 = vmul.f32 %v485, %v41
    %v499 = vmul.f32 %v490, %v41
    %v500 = vmul.f32 %v495, %v41
    %v501 = vadd.f32 %v455, %v497
    %v502 = vadd.f32 %v460, %v498
    %v503 = vadd.f32 %v465, %v499
    %v504 = vadd.f32 %v470, %v500
    %505 = vset.pattern.permute.xlu0 1
    %506 = vperm.xlu0 %505, %v473
    %v507 = vpop.permute.xlu0 %506
    %509 = vset.pattern.permute.xlu0 1
    %510 = vperm.xlu0 %509, %v474
    %v511 = vpop.permute.xlu0 %510
    %513 = vset.pattern.permute.xlu0 1
    %514 = vperm.xlu0 %513, %v475
    %v515 = vpop.permute.xlu0 %514
    %517 = vset.pattern.permute.xlu0 1
    %518 = vperm.xlu0 %517, %v476
    %v519 = vpop.permute.xlu0 %518
    %v522 = vlaneseq
    %v523 = vshrl.u32 %v522, 7
    %v524 = vsub.s32 0, %v523
    %v525 = vrot.slane %v30, %v524
    %v527 = vmul.f32 %v507, %v525
    %v528 = vmul.f32 %v511, %v525
    %v529 = vmul.f32 %v515, %v525
    %v530 = vmul.f32 %v519, %v525
    %v531 = vadd.f32 %v501, %v527
    %v532 = vadd.f32 %v502, %v528
    %v533 = vadd.f32 %v503, %v529
    %v534 = vadd.f32 %v504, %v530
    %535 = vset.pattern.permute.xlu0 2
    %536 = vperm.xlu0 %535, %v473
    %v537 = vpop.permute.xlu0 %536
    %539 = vset.pattern.permute.xlu0 2
    %540 = vperm.xlu0 %539, %v474
    %v541 = vpop.permute.xlu0 %540
    %543 = vset.pattern.permute.xlu0 2
    %544 = vperm.xlu0 %543, %v475
    %v545 = vpop.permute.xlu0 %544
    %547 = vset.pattern.permute.xlu0 2
    %548 = vperm.xlu0 %547, %v476
    %v549 = vpop.permute.xlu0 %548
    %v551 = vlaneseq
    %v552 = vshrl.u32 %v551, 7
    %v553 = vsub.s32 0, %v552
    %v554 = vrot.slane %v269, %v553
    %v555 = vmul.f32 %v537, %v554
    %v556 = vmul.f32 %v541, %v554
    %v557 = vmul.f32 %v545, %v554
    %v558 = vmul.f32 %v549, %v554
    %v559 = vadd.f32 %v531, %v555
    %v560 = vadd.f32 %v532, %v556
    %v561 = vadd.f32 %v533, %v557
    %v562 = vadd.f32 %v534, %v558
    %563 = vset.pattern.permute.xlu0 3
    %564 = vperm.xlu0 %563, %v473
    %v565 = vpop.permute.xlu0 %564
    %567 = vset.pattern.permute.xlu0 3
    %568 = vperm.xlu0 %567, %v474
    %v569 = vpop.permute.xlu0 %568
    %571 = vset.pattern.permute.xlu0 3
    %572 = vperm.xlu0 %571, %v475
    %v573 = vpop.permute.xlu0 %572
    %575 = vset.pattern.permute.xlu0 3
    %576 = vperm.xlu0 %575, %v476
    %v577 = vpop.permute.xlu0 %576
    %v579 = vadd.f32 %v559, %v565
    %v580 = vadd.f32 %v560, %v569
    %v581 = vadd.f32 %v561, %v573
    %v582 = vadd.f32 %v562, %v577
    %583 = vst [vmem:[#allocation2] sm:$0xff] %v579
    %584 = vst [vmem:[#allocation2 + $0x8] sm:$0xff] %v580
    %585 = vst [vmem:[#allocation2 + $0x10] sm:$0xff] %v581
    %586 = vst [vmem:[#allocation2 + $0x18] sm:$0xff] %v582
    // Predicated region
    $region26: #{tpu_custom_call.1} parent=1 // pred_check
      _
    $region27: #{tpu_custom_call.1} parent=1 // pred_check_branch
      %588 = sbr.rel (0) target = $region29
    $region28: #{tpu_custom_call.1} parent=1 // pred_region
      %s590 = ssub.s32 512, 512
      %591 = vsyncadd [#allocation3], %s590
      %s592 = sshll.u32 [#allocation2], 4
      %s593 = int_to_ptr.vmem [resolvable:$true] %s592
      %598 = dma.vmem_to_hbm [thread:$0]  %s593, 512, %s6, [#allocation3], 128, 128, 8
    $region29: #{tpu_custom_call.1} parent=1 // pred_fallthru
      _
    // Predicated region
    $region30: #{tpu_custom_call.1} parent=1 // pred_check
      _
    $region31: #{tpu_custom_call.1} parent=1 // pred_check_branch
      %600 = sbr.rel (0) target = $region33
    $region32: #{tpu_custom_call.1} parent=1 // pred_region
      %601 = dma.done [#allocation3], 512
    $region33: #{tpu_custom_call.1} parent=1 // pred_fallthru
      _
    %602 = vsyncpa [#allocation3], 1

</llo_original>
